<compile_context>
chip_gen: v5e
topology: v5e:2x2
jax: 0.10.0
libtpu: 0.0.40
codegen_flags: <defaults>
</compile_context>

<pallas_src>
import jax
import jax.numpy as jnp
from jax.experimental import pallas as pl
from jax.experimental.pallas import tpu as pltpu


def _patch_embed_kernel(x_ref, w_ref, cls_ref, pos_ref, out_ref):
    # x_ref:   (Bb*N, P)     flattened patch rows for Bb batches
    # w_ref:   (P, Et)       weight tile (E-tile of the projection)
    # cls_ref: (1, Et)       class_token + pos[:, 0] (batch-invariant row)
    # pos_ref: (N, Et)       position embeddings for rows 1..N
    # out_ref: (Bb, N+1, Et)
    Bb, n_plus_1, Et = out_ref.shape
    N = n_plus_1 - 1

    # MXU matmul over the fused (Bb*N) x P x Et problem, f32 accumulation.
    proj = jnp.dot(x_ref[...], w_ref[...],
                   preferred_element_type=jnp.float32)            # (Bb*N, Et)

    # Epilogue: add position embeddings (broadcast over the batch block) and
    # store straight into rows 1..N — no concatenate, no extra HBM pass.
    proj = proj.reshape(Bb, N, Et) + pos_ref[...][None].astype(jnp.float32)
    out_ref[:, 1:, :] = proj.astype(out_ref.dtype)

    # Class-token row: precomputed (cls + pos0) in the wrapper, broadcast-store.
    cls = cls_ref[...].astype(out_ref.dtype)                       # (1, Et)
    out_ref[:, 0:1, :] = jnp.broadcast_to(cls[None], (Bb, 1, Et))


def _round_up(x, m):
    return (x + m - 1) // m * m


def patch_embedder(patches, weight, class_token, position_embeddings):
    """patches: [B, N, P], weight: [P, E], class_token: [1, E],
    position_embeddings: [1, N+1, E] -> [B, N+1, E]"""
    B, N, P = patches.shape
    Pw, E = weight.shape
    assert Pw == P
    out_dtype = patches.dtype

    # ---- wrapper-side (batch-invariant, cheap) prep ------------------------
    cls_row = class_token + position_embeddings[:, 0, :]           # (1, E)
    pos_rest = position_embeddings[0, 1:, :]                       # (N, E)

    # Pad embedding dim to a multiple of 128 so every store is lane-dense.
    E_pad = _round_up(E, 128)
    w = weight
    if E_pad != E:
        pad = [(0, 0), (0, E_pad - E)]
        w = jnp.pad(w, pad)
        cls_row = jnp.pad(cls_row, pad)
        pos_rest = jnp.pad(pos_rest, pad)

    # Flatten batch into the matmul M dimension (contiguous, free reshape).
    x_flat = patches.reshape(B * N, P)

    # ---- joint tile selection ----------------------------------------------
    in_b = jnp.dtype(patches.dtype).itemsize
    out_b = jnp.dtype(out_dtype).itemsize
    w_b = jnp.dtype(w.dtype).itemsize
    budget = 20 * 1024 * 1024          # conservative; fits 32 MiB scoped VMEM

    def vmem_bytes(bb, et):
        return (2 * bb * N * P * in_b                 # patch tile (dbl-buffered)
                + 2 * bb * (N + 1) * et * out_b       # out tile   (dbl-buffered)
                + 2 * (P + N + 1) * et * w_b          # weight + pos + cls tiles
                + 2 * bb * N * et * 4)                # f32 matmul result temp

    # Lane tiles: multiples of 128 that divide E_pad, largest first.
    et_cands = [e for e in range(E_pad, 0, -128) if E_pad % e == 0]
    # Batch blocks: divisors of B keeping (Bb*N) sublane-legal, largest first.
    bb_cands = [bb for bb in range(B, 0, -1)
                if B % bb == 0 and ((bb * N) % 8 == 0 or bb == B)]

    def pick():
        for et in et_cands:
            for bb in bb_cands:
                if vmem_bytes(bb, et) <= budget:
                    return bb, et
        return bb_cands[-1], et_cands[-1]

    Bb, Et = pick()

    # If the whole problem collapsed into a single program, split the batch so
    # megacore / both v7x TensorCores get work (VMEM use only shrinks).
    if (E_pad // Et) * (B // Bb) == 1:
        for bb in bb_cands:
            if bb < Bb:
                Bb = bb
                break

    n_e_tiles = E_pad // Et
    n_b_blocks = B // Bb

    # Grid: E tiles outer (weight / pos / cls stay resident across the inner
    # batch-block loop), batch blocks inner. Both axes independent.
    grid_spec = pltpu.PrefetchScalarGridSpec(
        num_scalar_prefetch=0,
        grid=(n_e_tiles, n_b_blocks),
        in_specs=[
            pl.BlockSpec((Bb * N, P), lambda ej, bi: (bi, 0)),      # patches
            pl.BlockSpec((P, Et), lambda ej, bi: (0, ej)),          # weight
            pl.BlockSpec((1, Et), lambda ej, bi: (0, ej)),          # cls + pos0
            pl.BlockSpec((N, Et), lambda ej, bi: (0, ej)),          # pos rows 1..N
        ],
        out_specs=pl.BlockSpec((Bb, N + 1, Et), lambda ej, bi: (bi, 0, ej)),
    )

    cost = pl.CostEstimate(
        flops=2 * B * N * P * E_pad,
        transcendentals=0,
        bytes_accessed=(x_flat.size * in_b + w.size * w_b
                        + pos_rest.size * w_b + cls_row.size * w_b
                        + B * (N + 1) * E_pad * out_b),
    )

    out_padded = pl.pallas_call(
        _patch_embed_kernel,
        out_shape=jax.ShapeDtypeStruct((B, N + 1, E_pad), out_dtype),
        grid_spec=grid_spec,
        compiler_params=pltpu.CompilerParams(
            dimension_semantics=("parallel", "parallel"),
            vmem_limit_bytes=32 * 1024 * 1024,
        ),
        cost_estimate=cost,
    )(x_flat, w, cls_row, pos_rest)

    if E_pad != E:
        out_padded = out_padded[..., :E]
    return out_padded


if __name__ == "__main__":
    # Small shapes consistent with the module's forward.
    B, N, P, E = 2, 8, 16, 32   # batch, num_patches, patch_length, embedding_dim
    key = jax.random.PRNGKey(0)
    k_x, k_w, k_cls, k_pos = jax.random.split(key, 4)

    # Deterministic synthetic parameters (match the module's shapes):
    #   class_token:            (1, E), uniform(-1, 1)
    #   linear_layer.weight^T:  (P, E)  (bias=False)
    #   position_embeddings:    (1, 1+N, E), uniform(-1, 1)
    patches = jax.random.normal(k_x, (B, N, P), dtype=jnp.float32)
    weight = jax.random.uniform(k_w, (P, E), dtype=jnp.float32,
                                minval=-1.0, maxval=1.0)
    class_token = jax.random.uniform(k_cls, (1, E), dtype=jnp.float32,
                                     minval=-1.0, maxval=1.0)
    position_embeddings = jax.random.uniform(k_pos, (1, 1 + N, E),
                                             dtype=jnp.float32,
                                             minval=-1.0, maxval=1.0)

    out = patch_embedder(patches, weight, class_token, position_embeddings)
    out = jax.block_until_ready(out)

    # Plain-JAX reference of the PyTorch forward semantics.
    proj_ref = jnp.einsum("bnp,pe->bne", patches, weight)
    cls_ref = jnp.broadcast_to(class_token[None], (B, 1, E))
    ref = jnp.concatenate([cls_ref, proj_ref], axis=1) + position_embeddings

    assert out.shape == (B, N + 1, E)
    assert jnp.allclose(out, ref, atol=1e-5, rtol=1e-5)
    print("KERNEL_OK")
</pallas_src>

<mosaic_0001>
module attributes {stable_mosaic.version = 11 : i64} {
  func.func @_patch_embed_kernel(%arg0: i32, %arg1: i32, %arg2: memref<8x16xf32, #tpu.memory_space<vmem>>, %arg3: memref<16x128xf32, #tpu.memory_space<vmem>>, %arg4: memref<1x128xf32, #tpu.memory_space<vmem>>, %arg5: memref<8x128xf32, #tpu.memory_space<vmem>>, %arg6: memref<1x9x128xf32, #tpu.memory_space<vmem>>) attributes {dimension_semantics = [#tpu.dimension_semantics<parallel>, #tpu.dimension_semantics<parallel>], iteration_bounds = array<i64: 1, 2>, scalar_prefetch = 0 : i64, scratch_operands = 0 : i64, tpu.core_type = #tpu.core_type<tc>, window_params = [{transform_indices = @transform_0, window_bounds = array<i64: 8, 16>}, {transform_indices = @transform_1, window_bounds = array<i64: 16, 128>}, {transform_indices = @transform_2, window_bounds = array<i64: 1, 128>}, {transform_indices = @transform_3, window_bounds = array<i64: 8, 128>}, {transform_indices = @transform_4, window_bounds = array<i64: 1, 9, 128>}]} {
    %c0 = arith.constant 0 : index
    %c0_0 = arith.constant 0 : index
    %0 = vector.load %arg2[%c0, %c0_0] : memref<8x16xf32, #tpu.memory_space<vmem>>, vector<8x16xf32>
    %c0_1 = arith.constant 0 : index
    %c0_2 = arith.constant 0 : index
    %1 = vector.load %arg3[%c0_1, %c0_2] : memref<16x128xf32, #tpu.memory_space<vmem>>, vector<16x128xf32>
    %cst = arith.constant dense<0.000000e+00> : vector<8x128xf32>
    %2 = tpu.matmul %0, %1, %cst {dimension_numbers = #tpu.dot_dimension_numbers<[1], [0], [0], [1], [0, 0, 1, 1], [], []>} : vector<8x16xf32>, vector<16x128xf32>, vector<8x128xf32> -> vector<8x128xf32>
    %3 = vector.shape_cast %2 : vector<8x128xf32> to vector<1x8x128xf32>
    %c0_3 = arith.constant 0 : index
    %c0_4 = arith.constant 0 : index
    %4 = vector.load %arg5[%c0_3, %c0_4] : memref<8x128xf32, #tpu.memory_space<vmem>>, vector<8x128xf32>
    %5 = vector.shape_cast %4 : vector<8x128xf32> to vector<1x8x128xf32>
    %6 = arith.addf %3, %5 : vector<1x8x128xf32>
    %c0_5 = arith.constant 0 : index
    %c1 = arith.constant 1 : index
    %c0_6 = arith.constant 0 : index
    %7 = vector.load %arg6[%c0_5, %c1, %c0_6] : memref<1x9x128xf32, #tpu.memory_space<vmem>>, vector<1x8x128xf32>
    tpu.vector_store %arg6[%c0_5, %c1, %c0_6], %6 {strides = array<i32>} : memref<1x9x128xf32, #tpu.memory_space<vmem>>, vector<1x8x128xf32>,
    %c0_7 = arith.constant 0 : index
    %c0_8 = arith.constant 0 : index
    %8 = vector.load %arg4[%c0_7, %c0_8] : memref<1x128xf32, #tpu.memory_space<vmem>>, vector<1x128xf32>
    %9 = vector.shape_cast %8 : vector<1x128xf32> to vector<1x1x128xf32>
    %c0_9 = arith.constant 0 : index
    %c0_10 = arith.constant 0 : index
    %c0_11 = arith.constant 0 : index
    %10 = vector.load %arg6[%c0_9, %c0_10, %c0_11] : memref<1x9x128xf32, #tpu.memory_space<vmem>>, vector<1x1x128xf32>
    tpu.vector_store %arg6[%c0_9, %c0_10, %c0_11], %9 {strides = array<i32>} : memref<1x9x128xf32, #tpu.memory_space<vmem>>, vector<1x1x128xf32>,
    return
  }
  func.func @transform_0(%arg0: i32, %arg1: i32) -> (i32, i32) {
    %c0_i32 = arith.constant 0 : i32
    %c0_i32_0 = arith.constant 0 : i32
    return %arg1, %c0_i32 : i32, i32
  }
  func.func @transform_1(%arg0: i32, %arg1: i32) -> (i32, i32) {
    %c0_i32 = arith.constant 0 : i32
    %c0_i32_0 = arith.constant 0 : i32
    return %c0_i32, %arg0 : i32, i32
  }
  func.func @transform_2(%arg0: i32, %arg1: i32) -> (i32, i32) {
    %c0_i32 = arith.constant 0 : i32
    %c0_i32_0 = arith.constant 0 : i32
    return %c0_i32, %arg0 : i32, i32
  }
  func.func @transform_3(%arg0: i32, %arg1: i32) -> (i32, i32) {
    %c0_i32 = arith.constant 0 : i32
    %c0_i32_0 = arith.constant 0 : i32
    return %c0_i32, %arg0 : i32, i32
  }
  func.func @transform_4(%arg0: i32, %arg1: i32) -> (i32, i32, i32) {
    %c0_i32 = arith.constant 0 : i32
    %c0_i32_0 = arith.constant 0 : i32
    return %arg1, %c0_i32, %arg0 : i32, i32, i32
  }
}

</mosaic_0001>

<llo_original>
// kernel: tpu_custom_call.1
$region0: #{tpu_custom_call.1}
  #allocation0 [shape = 'u32[]', space=smem, size = 0x4, offset = 0x4, fixed_abs, tag = 'smem constant byte address 0x4 - core index']
  #allocation1 [shape = 'u32[72,128]{1,0:T(1,128)}', space=vmem, size = 0x9000, scoped, tag = 'internal scratch']
  %s0 = inlined_call_operand.hbm [shape: f32[16,16], index: 0, kind: input, shape index: {}]
  %s1 = inlined_call_operand.hbm [shape: f32[16,128], index: 1, kind: input, shape index: {}]
  %s2 = inlined_call_operand.vmem [shape: f32[1,128], index: 2, kind: input, shape index: {}]
  %s3 = inlined_call_operand.hbm [shape: f32[8,128], index: 3, kind: input, shape index: {}]
  %s4 = inlined_call_operand.vmem [shape: f32[2,9,128], index: 4, kind: output, shape index: {}]
  %s5 = sld [smem:[#allocation0]]
  $region61: #{tpu_custom_call.1} parent=0
    _
  %s7 = ssub.s32 1, %s5
  %s8 = scalar_select 0, %s7, %s5
  $region1: #{tpu_custom_call.1} parent=0
    #allocation2 [shape = 'u8[8192]{0}', space=vmem, size = 0x2000, scoped, tag = 'input window, operand 0']
    #allocation3 [shape = 's32[2]{0}', space=sflag, size = 0x8, scoped, tag = 'scoped memory for tpu_custom_call.1']
    #allocation4 [shape = 'u8[8192]{0}', space=vmem, size = 0x2000, scoped, tag = 'input window, operand 1, single buffered']
    #allocation5 [shape = 's32[1]{0}', space=sflag, size = 0x4, scoped, tag = 'scoped memory for tpu_custom_call.1']
    #allocation6 [shape = 'u8[4096]{0}', space=vmem, size = 0x1000, scoped, tag = 'input window, operand 3, single buffered']
    %9 = vsyncpa [#allocation3], 0
    %s10 = scalar_lea.sflag [#allocation3], 1
    %11 = vsyncpa %s10, 0
    %12 = vsyncpa [#allocation5], 0
    loop: start=0, step=1, limit=4
    $region2: #{tpu_custom_call.1} parent=1 // loop_pre_header
      _
    $region3: #{tpu_custom_call.1} parent=1 // loop_header
      %s14 = sphi 0, %s18
      %p15 = scmp.ge.s32.totalorder %s14, 4
      %s21 = sphi 0, %s33
      %s22 = sphi 0, %s29
      %s23 = sphi 0, %s21
      %s24 = sphi 0, %s22
      %s25 = sphi 0, %s23
      %s26 = sphi 0, %s24
      %s36 = sphi 0, %s38
      %s39 = sphi 0, %s36
      %s40 = sphi 0, %s39
      %s56 = sphi 0, %s40
      %s62 = sphi 0, %s64
      %s65 = sphi 0, %s62
      %s66 = sphi 0, %s65
      %s82 = sphi 0, %s66
      %s88 = sphi 0, %s90
      %s91 = sphi 0, %s88
      %s92 = sphi 0, %s91
      %s108 = sphi 0, %s92
      %s114 = sphi 0, %s116
      %s117 = sphi 0, %s114
      %s118 = sphi 0, %s117
      %s134 = sphi 0, %s118
      %s142 = sphi 0, %s144
      %s145 = sphi 0, %s142
      %s146 = sphi 0, %s145
      %s162 = sphi 0, %s146
    $region4: #{tpu_custom_call.1} parent=1 // loop_header_branch
      %17 = sbr.rel (%p15) target = $region8
    $region5: #{tpu_custom_call.1} parent=1 // loop_body
      %s19 = ssub.s32 %s14, 1
      %s20 = ssub.s32 %s14, 2
      %s27 = sadd.s32 1, %s22
      %p28 = scmp.ge.s32.totalorder %s27, 2
      %s29 = scalar_select %p28, 0, %s27
      %s30 = sadd.s32 1, %s21
      %s31 = scalar_select %p28, %s30, %s21
      %p32 = scmp.ge.s32.totalorder %s31, 1
      %s33 = scalar_select %p32, 0, %s31
      %s34 = ssub.s32 %s22, %s29
      %p35 = scmp.eq.s32.totalorder %s34, 0
      %s37 = sadd.s32 %s36, 1
      %s38 = scalar_select %p35, %s36, %s37
      %p41 = pneg %p35
      %p42 = scmp.eq.s32.totalorder %s14, 1
      %p43 = por %p41, %p42
      %p44 = scmp.ne.s32.totalorder %s36, %s39
      %p45 = scmp.eq.s32.totalorder %s14, 0
      %p46 = por %p44, %p45
      %p47 = scmp.ne.s32.totalorder %s36, %s39
      %p48 = scmp.eq.s32.totalorder %s19, 1
      %p49 = por %p47, %p48
      %p50 = scmp.ne.s32.totalorder %s39, %s40
      %p51 = scmp.eq.s32.totalorder %s19, 0
      %p52 = por %p50, %p51
      %p53 = scmp.ne.s32.totalorder %s39, %s40
      %p54 = scmp.eq.s32.totalorder %s20, 1
      %p55 = por %p53, %p54
      %p57 = scmp.ne.s32.totalorder %s40, %s56
      %p58 = scmp.eq.s32.totalorder %s20, 0
      %p59 = por %p57, %p58
      %s60 = ssub.s32 %s21, %s33
      %p61 = scmp.eq.s32.totalorder %s60, 0
      %s63 = sadd.s32 %s62, 1
      %s64 = scalar_select %p61, %s62, %s63
      %p67 = pneg %p61
      %p68 = scmp.eq.s32.totalorder %s14, 1
      %p69 = por %p67, %p68
      %p70 = scmp.ne.s32.totalorder %s62, %s65
      %p71 = scmp.eq.s32.totalorder %s14, 0
      %p72 = por %p70, %p71
      %p73 = scmp.ne.s32.totalorder %s62, %s65
      %p74 = scmp.eq.s32.totalorder %s19, 1
      %p75 = por %p73, %p74
      %p76 = scmp.ne.s32.totalorder %s65, %s66
      %p77 = scmp.eq.s32.totalorder %s19, 0
      %p78 = por %p76, %p77
      %p79 = scmp.ne.s32.totalorder %s65, %s66
      %p80 = scmp.eq.s32.totalorder %s20, 1
      %p81 = por %p79, %p80
      %p83 = scmp.ne.s32.totalorder %s66, %s82
      %p84 = scmp.eq.s32.totalorder %s20, 0
      %p85 = por %p83, %p84
      %s86 = ssub.s32 %s21, %s33
      %p87 = scmp.eq.s32.totalorder %s86, 0
      %s89 = sadd.s32 %s88, 1
      %s90 = scalar_select %p87, %s88, %s89
      %p93 = pneg %p87
      %p94 = scmp.eq.s32.totalorder %s14, 1
      %p95 = por %p93, %p94
      %p96 = scmp.ne.s32.totalorder %s88, %s91
      %p97 = scmp.eq.s32.totalorder %s14, 0
      %p98 = por %p96, %p97
      %p99 = scmp.ne.s32.totalorder %s88, %s91
      %p100 = scmp.eq.s32.totalorder %s19, 1
      %p101 = por %p99, %p100
      %p102 = scmp.ne.s32.totalorder %s91, %s92
      %p103 = scmp.eq.s32.totalorder %s19, 0
      %p104 = por %p102, %p103
      %p105 = scmp.ne.s32.totalorder %s91, %s92
      %p106 = scmp.eq.s32.totalorder %s20, 1
      %p107 = por %p105, %p106
      %p109 = scmp.ne.s32.totalorder %s92, %s108
      %p110 = scmp.eq.s32.totalorder %s20, 0
      %p111 = por %p109, %p110
      %s112 = ssub.s32 %s21, %s33
      %p113 = scmp.eq.s32.totalorder %s112, 0
      %s115 = sadd.s32 %s114, 1
      %s116 = scalar_select %p113, %s114, %s115
      %p119 = pneg %p113
      %p120 = scmp.eq.s32.totalorder %s14, 1
      %p121 = por %p119, %p120
      %p122 = scmp.ne.s32.totalorder %s114, %s117
      %p123 = scmp.eq.s32.totalorder %s14, 0
      %p124 = por %p122, %p123
      %p125 = scmp.ne.s32.totalorder %s114, %s117
      %p126 = scmp.eq.s32.totalorder %s19, 1
      %p127 = por %p125, %p126
      %p128 = scmp.ne.s32.totalorder %s117, %s118
      %p129 = scmp.eq.s32.totalorder %s19, 0
      %p130 = por %p128, %p129
      %p131 = scmp.ne.s32.totalorder %s117, %s118
      %p132 = scmp.eq.s32.totalorder %s20, 1
      %p133 = por %p131, %p132
      %p135 = scmp.ne.s32.totalorder %s118, %s134
      %p136 = scmp.eq.s32.totalorder %s20, 0
      %p137 = por %p135, %p136
      %s138 = ssub.s32 %s22, %s29
      %s139 = ssub.s32 %s21, %s33
      %s140 = sor.u32 %s138, %s139
      %p141 = scmp.eq.s32.totalorder %s140, 0
      %s143 = sadd.s32 %s142, 1
      %s144 = scalar_select %p141, %s142, %s143
      %p147 = pneg %p141
      %p148 = scmp.eq.s32.totalorder %s14, 1
      %p149 = por %p147, %p148
      %p150 = scmp.ne.s32.totalorder %s142, %s145
      %p151 = scmp.eq.s32.totalorder %s14, 0
      %p152 = por %p150, %p151
      %p153 = scmp.ne.s32.totalorder %s142, %s145
      %p154 = scmp.eq.s32.totalorder %s19, 1
      %p155 = por %p153, %p154
      %p156 = scmp.ne.s32.totalorder %s145, %s146
      %p157 = scmp.eq.s32.totalorder %s19, 0
      %p158 = por %p156, %p157
      %p159 = scmp.ne.s32.totalorder %s145, %s146
      %p160 = scmp.eq.s32.totalorder %s20, 1
      %p161 = por %p159, %p160
      %p163 = scmp.ne.s32.totalorder %s146, %s162
      %p164 = scmp.eq.s32.totalorder %s20, 0
      %p165 = por %p163, %p164
      %p166 = scmp.le.s32.totalorder 1, %s14
      %p167 = scmp.lt.s32.totalorder %s14, 3
      %p168 = pnand %p166, %p167
      %p169 = pneg %p168
      // Predicated region
      $region9: #{tpu_custom_call.1} parent=5 // pred_check
        _
      $region10: #{tpu_custom_call.1} parent=5 // pred_check_branch
        %171 = sbr.rel (%p168) target = $region12
      $region11: #{tpu_custom_call.1} parent=5 // pred_region
        %s172 = ssub.s32 %s14, 1
        // Predicated region
        $region13: #{tpu_custom_call.1} parent=11 // pred_check
          %p173 = pneg %p78
        $region14: #{tpu_custom_call.1} parent=11 // pred_check_branch
          %175 = sbr.rel (%p173) target = $region16
        $region15: #{tpu_custom_call.1} parent=11 // pred_region
          %177 = vsyncadd [#allocation5], 0
          %s178 = smul.addr %s23, 8
          %s179 = scalar_lea.hbm %s1, %s178
          %s180 = sshll.u32 %s179, 4
          %s181 = int_to_ptr.hbm [resolvable:$true] %s180
          %s182 = sshll.u32 [#allocation4], 4
          %s183 = int_to_ptr.vmem [resolvable:$true] %s182
          %188 = dma.hbm_to_vmem [thread:$0]  %s181, 256, %s183, [#allocation5], 128, 128, 8
        $region16: #{tpu_custom_call.1} parent=11 // pred_fallthru
          _
        // Predicated region
        $region17: #{tpu_custom_call.1} parent=11 // pred_check
          %p189 = pneg %p104
        $region18: #{tpu_custom_call.1} parent=11 // pred_check_branch
          %191 = sbr.rel (%p189) target = $region20
        $region19: #{tpu_custom_call.1} parent=11 // pred_region
          %p192 = scmp.lt.s32.totalorder %s23, 0
          %s193 = scalar_select %p192, %s23, 0
          %s194 = scalar_lea.vmem %s2, %s193
        $region20: #{tpu_custom_call.1} parent=11 // pred_fallthru
          _
        // Predicated region
        $region21: #{tpu_custom_call.1} parent=11 // pred_check
          %p195 = pneg %p130
        $region22: #{tpu_custom_call.1} parent=11 // pred_check_branch
          %197 = sbr.rel (%p195) target = $region24
        $region23: #{tpu_custom_call.1} parent=11 // pred_region
          %199 = vsyncadd [#allocation5], 0
          %s200 = smul.addr %s23, 8
          %s201 = scalar_lea.hbm %s3, %s200
          %s203 = sshll.u32 %s201, 4
          %s204 = int_to_ptr.hbm [resolvable:$true] %s203
          %s205 = sshll.u32 [#allocation6], 4
          %s206 = int_to_ptr.vmem [resolvable:$true] %s205
          %208 = dma.hbm_to_vmem [thread:$0]  %s204, 128, %s206, [#allocation5]
        $region24: #{tpu_custom_call.1} parent=11 // pred_fallthru
          _
      $region12: #{tpu_custom_call.1} parent=5 // pred_fallthru
        _
      %p209 = scmp.lt.s32.totalorder %s14, 2
      // Predicated region
      $region25: #{tpu_custom_call.1} parent=5 // pred_check
        %p210 = pneg %p209
      $region26: #{tpu_custom_call.1} parent=5 // pred_check_branch
        %212 = sbr.rel (%p210) target = $region28
      $region27: #{tpu_custom_call.1} parent=5 // pred_region
        // Predicated region
        $region29: #{tpu_custom_call.1} parent=27 // pred_check
          %p213 = pneg %p46
        $region30: #{tpu_custom_call.1} parent=27 // pred_check_branch
          %215 = sbr.rel (%p213) target = $region32
        $region31: #{tpu_custom_call.1} parent=27 // pred_region
          %s216 = sand.u32 %s36, 1
          %s217 = scalar_lea.sflag [#allocation3], %s216
          %s218 = sand.u32 %s36, 1
          %s219 = smul.addr %s218, 8
          %s220 = scalar_lea.vmem [#allocation2], %s219
          %222 = vsyncadd %s217, 0
          %s223 = smul.addr %s22, 8
          %s224 = scalar_lea.hbm %s0, %s223
          %s226 = sshll.u32 %s224, 4
          %s227 = int_to_ptr.hbm [resolvable:$true] %s226
          %s228 = sshll.u32 %s220, 4
          %s229 = int_to_ptr.vmem [resolvable:$true] %s228
          %231 = dma.hbm_to_vmem [thread:$0]  %s227, 128, %s229, %s217
        $region32: #{tpu_custom_call.1} parent=27 // pred_fallthru
          _
      $region28: #{tpu_custom_call.1} parent=5 // pred_fallthru
        _
      %p232 = scmp.le.s32.totalorder 1, %s14
      %p233 = scmp.lt.s32.totalorder %s14, 3
      %p234 = pnand %p232, %p233
      %p235 = pneg %p234
      // Predicated region
      $region33: #{tpu_custom_call.1} parent=5 // pred_check
        _
      $region34: #{tpu_custom_call.1} parent=5 // pred_check_branch
        %237 = sbr.rel (%p234) target = $region36
      $region35: #{tpu_custom_call.1} parent=5 // pred_region
        %s238 = ssub.s32 %s14, 1
        %s239 = sand.u32 %s39, 1
        %s240 = scalar_lea.sflag [#allocation3], %s239
        %s241 = sand.u32 %s39, 1
        %s242 = smul.addr %s241, 8
        %s243 = scalar_lea.vmem [#allocation2], %s242
        // Predicated region
        $region37: #{tpu_custom_call.1} parent=35 // pred_check
          %p244 = pneg %p52
        $region38: #{tpu_custom_call.1} parent=35 // pred_check_branch
          %246 = sbr.rel (%p244) target = $region40
        $region39: #{tpu_custom_call.1} parent=35 // pred_region
          %248 = dma.done %s240, 128
        $region40: #{tpu_custom_call.1} parent=35 // pred_fallthru
          _
        // Predicated region
        $region41: #{tpu_custom_call.1} parent=35 // pred_check
          %p249 = pneg %p78
        $region42: #{tpu_custom_call.1} parent=35 // pred_check_branch
          %251 = sbr.rel (%p249) target = $region44
        $region43: #{tpu_custom_call.1} parent=35 // pred_region
          %253 = dma.done [#allocation5], 256
        $region44: #{tpu_custom_call.1} parent=35 // pred_fallthru
          _
        // Predicated region
        $region45: #{tpu_custom_call.1} parent=35 // pred_check
          %p254 = pneg %p130
        $region46: #{tpu_custom_call.1} parent=35 // pred_check_branch
          %256 = sbr.rel (%p254) target = $region48
        $region47: #{tpu_custom_call.1} parent=35 // pred_region
          %258 = dma.done [#allocation5], 128
        $region48: #{tpu_custom_call.1} parent=35 // pred_fallthru
          _
        %s259 = sand.u32 %s39, 1
        %s260 = scalar_lea.sflag [#allocation3], %s259
        %s261 = sand.u32 %s39, 1
        %s262 = smul.addr %s261, 8
        %s263 = scalar_lea.vmem [#allocation2], %s262
        %p264 = pneg %p52
        %p265 = pneg %p49
        %p266 = pneg %p78
        %p267 = pneg %p75
        %p268 = scmp.lt.s32.totalorder %s23, 0
        %s269 = scalar_select %p268, %s23, 0
        %s270 = scalar_lea.vmem %s2, %s269
        %p271 = pneg %p104
        %p272 = pneg %p101
        %p273 = pneg %p130
        %p274 = pneg %p127
        %p275 = pneg %p158
        %p276 = pneg %p155
        %p277 = scmp.lt.s32.totalorder %s24, 1
        %s278 = scalar_select %p277, %s24, 1
        %p279 = scmp.lt.s32.totalorder %s23, 0
        %s280 = scalar_select %p279, %s23, 0
        %s281 = smul.addr %s278, 2
        %s282 = sadd.s32 %s280, %s281
        %s283 = smul.addr %s282, 8
        %s284 = scalar_lea.vmem %s4, %s283
        %p285 = scmp.lt.s32.totalorder %s23, 0
        %s286 = scalar_select %p285, %s23, 0
        %s287 = scalar_lea.vmem %s2, %s286
        %p288 = scmp.lt.s32.totalorder %s24, 1
        %s289 = scalar_select %p288, %s24, 1
        %p290 = scmp.lt.s32.totalorder %s23, 0
        %s291 = scalar_select %p290, %s23, 0
        %s292 = smul.addr %s289, 2
        %s293 = sadd.s32 %s291, %s292
        %s294 = smul.addr %s293, 8
        %s295 = scalar_lea.vmem %s4, %s294
        %v296 = vld [vmem:[%s243] sm:$0xff]
        %v297 = vld [vmem:[#allocation4] sm:$0xff]
        %v298 = vld [vmem:[#allocation4 + $0x8] sm:$0xff]
        %vm299 = vcmask 130048
        %v301 = vsel %vm299, %v296, 0
        %303 = vmatpush.msra.mxu0 0.0
        %304 = vmatpush.msra.mxu0 0.0
        %305 = vmatpush.msra.mxu0 0.0
        %306 = vmatpush.msra.mxu0 0.0
        %307 = vmatpush.msra.mxu0 0.0
        %308 = vmatpush.msra.mxu0 0.0
        %309 = vmatpush.msra.mxu0 0.0
        %310 = vmatpush.msra.mxu0 0.0
        %311 = vmatpush.msra.mxu0 0.0
        %312 = vmatpush.msra.mxu0 0.0
        %313 = vmatpush.msra.mxu0 0.0
        %314 = vmatpush.msra.mxu0 0.0
        %315 = vmatpush.msra.mxu0 0.0
        %316 = vmatpush.msra.mxu0 0.0
        %317 = vmatpush.msra.mxu0 %v298
        %318 = vmatpush.msra.mxu0 %v297
        %319 = vmatmul.f32.gmra.mxu0 %v301
        %v320 = vpop.f32.mrf.mxu0
        %v321 = vadd.f32 0.0, %v320
        %322 = vdwg.mxu0
        %v323 = vld [vmem:[#allocation6] sm:$0xff]
        %v324 = vadd.f32 %v321, %v323
        %325 = vst [vmem:[%s295 + $0x1] sm:$0xff] %v324
        %v326 = vld [vmem:[%s287] sm:$0x1]
        %327 = vst [vmem:[%s295] sm:$0x1] %v326
        %p328 = scmp.lt.s32.totalorder %s24, 1
        %s329 = scalar_select %p328, %s24, 1
        %p330 = scmp.lt.s32.totalorder %s23, 0
        %s331 = scalar_select %p330, %s23, 0
        %s332 = smul.addr %s329, 2
        %s333 = sadd.s32 %s331, %s332
        %s334 = smul.addr %s333, 8
        %s335 = scalar_lea.vmem %s4, %s334
        // Predicated region
        $region49: #{tpu_custom_call.1} parent=35 // pred_check
          %p336 = pneg %p155
        $region50: #{tpu_custom_call.1} parent=35 // pred_check_branch
          %338 = sbr.rel (%p336) target = $region52
        $region51: #{tpu_custom_call.1} parent=35 // pred_region
          _
        $region52: #{tpu_custom_call.1} parent=35 // pred_fallthru
          _
      $region36: #{tpu_custom_call.1} parent=5 // pred_fallthru
        _
      %p339 = scmp.le.s32.totalorder 2, %s14
      // Predicated region
      $region53: #{tpu_custom_call.1} parent=5 // pred_check
        %p340 = pneg %p339
      $region54: #{tpu_custom_call.1} parent=5 // pred_check_branch
        %342 = sbr.rel (%p340) target = $region56
      $region55: #{tpu_custom_call.1} parent=5 // pred_region
        %s343 = ssub.s32 %s14, 2
        // Predicated region
        $region57: #{tpu_custom_call.1} parent=55 // pred_check
          %p344 = pneg %p161
        $region58: #{tpu_custom_call.1} parent=55 // pred_check_branch
          %346 = sbr.rel (%p344) target = $region60
        $region59: #{tpu_custom_call.1} parent=55 // pred_region
          %p347 = scmp.lt.s32.totalorder %s26, 1
          %s348 = scalar_select %p347, %s26, 1
          %p349 = scmp.lt.s32.totalorder %s25, 0
          %s350 = scalar_select %p349, %s25, 0
          %s351 = smul.addr %s348, 2
          %s352 = sadd.s32 %s350, %s351
          %s353 = smul.addr %s352, 8
          %s354 = scalar_lea.vmem %s4, %s353
        $region60: #{tpu_custom_call.1} parent=55 // pred_fallthru
          _
      $region56: #{tpu_custom_call.1} parent=5 // pred_fallthru
        _
    $region6: #{tpu_custom_call.1} parent=1 // loop_footer
      %s18 = sadd.s32 1, %s14
    $region7: #{tpu_custom_call.1} parent=1 // loop_footer_branch
      %13 = sbr.rel target = $region3
    $region8: #{tpu_custom_call.1} parent=1 // loop_exit
      _
    %355 = vsyncpa [#allocation3], 1
    %s356 = scalar_lea.sflag [#allocation3], 1
    %357 = vsyncpa %s356, 1
    %358 = vsyncpa [#allocation5], 1

</llo_original>
